<compile_context>
chip_gen: v7x
topology: tpu7x:2x2x1
jax: 0.10.0
libtpu: 0.0.40
codegen_flags: <defaults>
</compile_context>

<pallas_src>
import functools
import math

import jax
import jax.numpy as jnp
from jax import lax
from jax.experimental import pallas as pl
from jax.experimental.pallas import tpu as pltpu


def _flash_gqa_kernel(q_ref, k_ref, v_ref, o_ref, m_ref, l_ref, acc_ref, *,
                      seqlen_q, block_q, block_kv, scale, causal, exp_dtype):
    """One (batch, kv-head, q-tile, kv-tile) grid step of flash GQA."""
    q_idx = pl.program_id(2)
    kv_idx = pl.program_id(3)

    @pl.when(kv_idx == 0)
    def _init():
        m_ref[...] = jnp.full(m_ref.shape, -jnp.inf, dtype=m_ref.dtype)
        l_ref[...] = jnp.zeros(l_ref.shape, dtype=l_ref.dtype)
        acc_ref[...] = jnp.zeros(acc_ref.shape, dtype=acc_ref.dtype)

    q_start = q_idx * block_q      # first fused-M row of this q tile
    kv_start = kv_idx * block_kv   # first key position of this kv tile

    def _compute():
        q = q_ref[0, 0]            # (block_q, D)  bf16 -> MXU native
        k = k_ref[0, 0]            # (block_kv, D)
        v = v_ref[0, 0]            # (block_kv, D)

        # Contract the D axes directly (no k.T materialization), f32 accum on
        # the MXU; scale the f32 scores (matches the reference's f32 scaling,
        # the multiply hides under the EUP/MXU-bound critical slot).
        s = lax.dot_general(q, k, (((1,), (1,)), ((), ())),
                            preferred_element_type=jnp.float32)
        s = s * scale

        if causal:
            # Fused row r -> query position (q_start + r) % Sq. Column/row
            # iotas broadcast inside the compare (no (bq,bk) int32 temps).
            qpos = (q_start + lax.broadcasted_iota(
                jnp.int32, (block_q, 1), 0)) % seqlen_q
            kpos = kv_start + lax.broadcasted_iota(
                jnp.int32, (1, block_kv), 1)
            # torch.triu(-inf, diagonal=1): mask keys strictly after qpos.
            s = jnp.where(kpos > qpos, -jnp.inf, s)

        # Online softmax update (m/l/acc persist across the kv grid axis).
        m_prev = m_ref[...]
        m_new = jnp.maximum(m_prev, jnp.max(s, axis=-1, keepdims=True))
        alpha = jnp.exp(m_prev - m_new)
        p = jnp.exp((s - m_new).astype(exp_dtype))
        p_f32 = p if p.dtype == jnp.float32 else p.astype(jnp.float32)
        l_ref[...] = alpha * l_ref[...] + jnp.sum(p_f32, axis=-1,
                                                  keepdims=True)
        acc_ref[...] = alpha * acc_ref[...] + jnp.dot(
            p.astype(v.dtype), v, preferred_element_type=jnp.float32)
        m_ref[...] = m_new

    if causal and (block_q % seqlen_q != 0):
        # q tile lies inside one query group (block_q | Sq): KV blocks fully
        # above the diagonal contribute nothing -> skip matmul/softmax/EUP.
        # (kv_start == 0 always passes, so m never stays -inf.)
        max_qpos = q_start % seqlen_q + (block_q - 1)
        pl.when(kv_start <= max_qpos)(_compute)
    else:
        # Non-causal, or the tile spans whole groups (max qpos = Sq-1) and KV
        # pruning already guarantees kv_start <= Sq-1: never skip.
        _compute()

    @pl.when(kv_idx == pl.num_programs(3) - 1)
    def _finalize():
        inv_l = pl.reciprocal(l_ref[...], approx=True)
        o_ref[0, 0] = (acc_ref[...] * inv_l).astype(o_ref.dtype)


def _device_kind():
    try:
        return jax.devices()[0].device_kind.lower()
    except Exception:
        return ""


def _tile_targets():
    kind = _device_kind()
    # v6e/v7x MXU is 256x256 -> prefer 256-multiple M tiles; v5e's MXU is
    # 4x128x128 and has the smallest scoped-VMEM default -> keep block_q=128.
    # (On v5e, pl.Buffered(3) on the K/V specs is a further option if DMA is
    # exposed; left at the default double-buffering here.)
    if "v5" in kind:
        return 128, 512
    return 256, 512


def _default_exp_dtype(dtype, head_dim):
    # bf16 exp (~2x EUP throughput) only where the EUP has bf16 (v6e/v7x) and
    # only in the EUP-bound D<128 regime; v5e's EUP is f32-only.
    kind = _device_kind()
    if (dtype == jnp.bfloat16 and head_dim < 128
            and any(t in kind for t in ("v6", "v7", "7x"))):
        return jnp.bfloat16
    return jnp.float32


def _choose_block_q(M, Sq, target):
    """Largest q tile <= target dividing M, with a simple causal row range:
    either block_q | Sq (tile inside one query group) or Sq | block_q."""
    if M <= target:
        return M
    best = 0
    for cand in range(8, min(target, M) + 1, 8):
        if M % cand == 0 and (Sq % cand == 0 or cand % Sq == 0):
            best = cand
    return best if best > 0 else M


def _choose_block_kv(Skv, target):
    """Largest divisor of Skv <= target that is a multiple of 16 (preferred,
    bf16 sublane packing) or 8; otherwise a single full-Skv block."""
    if Skv <= target:
        return Skv
    for align in (16, 8):
        best = 0
        for cand in range(align, min(target, Skv) + 1, align):
            if Skv % cand == 0:
                best = cand
        if best:
            return best
    return Skv


def gqa_attention(q, k, v, causal=True, block_q=None, block_kv=None,
                  exp_dtype=None):
    """q: [B, Hq, Sq, D]; k, v: [B, Hk, Skv, D]. Returns [B, Hq, Sq, D]."""
    B, Hq, Sq, D = q.shape
    _, Hk, Skv, Dk = k.shape
    assert D == Dk and Hq % Hk == 0
    g = Hq // Hk
    M = g * Sq
    scale = 1.0 / math.sqrt(D)

    target_q, target_kv = _tile_targets()

    # Causal key-range pruning: keys >= Sq are masked for every query row.
    kv_extent = min(Skv, Sq) if causal else Skv

    if block_q is None:
        block_q = _choose_block_q(M, Sq, target_q)
    if (M % block_q != 0 or (block_q % 8 != 0 and block_q != M)
            or not (Sq % block_q == 0 or block_q % Sq == 0)):
        raise ValueError(f"invalid block_q={block_q} for M={M}, Sq={Sq}")

    if block_kv is None:
        kv_target = min(target_kv, max(16, -(-kv_extent // 16) * 16))
        block_kv = _choose_block_kv(Skv, kv_target)
    if Skv % block_kv != 0 or (block_kv % 8 != 0 and block_kv != Skv):
        raise ValueError(f"invalid block_kv={block_kv} for Skv={Skv}")

    if exp_dtype is None:
        exp_dtype = _default_exp_dtype(q.dtype, D)

    nq = M // block_q
    # block_kv | Skv  =>  nkv * block_kv <= Skv, so the pruned grid never
    # reads K/V out of bounds; extra keys < nkv*block_kv are causally masked.
    nkv = pl.cdiv(kv_extent, block_kv)

    # Heads sharing a KV head are contiguous in the 'b (h g) n d' layout, so a
    # wrapper-side reshape fuses them into one MXU M-dimension of g*Sq.
    qf = q.reshape(B, Hk, M, D)

    kernel = functools.partial(
        _flash_gqa_kernel, seqlen_q=Sq, block_q=block_q, block_kv=block_kv,
        scale=scale, causal=causal, exp_dtype=exp_dtype)

    # Cost estimate reflecting causal pruning and tiled K/V re-reads.
    if causal:
        pairs = kv_extent * (kv_extent + 1) // 2 + max(0, Sq - kv_extent) * kv_extent
    else:
        pairs = Sq * kv_extent
    itemsize = q.dtype.itemsize
    bytes_io = (2 * B * Hq * Sq * D * itemsize                 # q read + out write
                + 2 * B * Hk * (nkv * block_kv) * D * k.dtype.itemsize * nq)
    cost = pl.CostEstimate(
        flops=int(4 * B * Hq * D * pairs),
        transcendentals=int(B * Hq * pairs),
        bytes_accessed=int(bytes_io),
    )

    # VMEM budget: double-buffered q/out and k/v tiles + f32 scratch (m/l
    # columns pad to 128 lanes). Explicit limit matters on v7x (64 MiB phys).
    vmem_est = (4 * block_q * D * itemsize                     # q + out (x2 bufs)
                + 4 * block_kv * D * k.dtype.itemsize          # k + v (x2 bufs)
                + block_q * D * 4                              # acc f32
                + 2 * block_q * 128 * 4)                       # m, l (padded)
    vmem_limit = int(min(max(2 * vmem_est, 32 * 1024 * 1024),
                         48 * 1024 * 1024))

    out = pl.pallas_call(
        kernel,
        out_shape=jax.ShapeDtypeStruct((B, Hk, M, D), q.dtype),
        grid_spec=pltpu.PrefetchScalarGridSpec(
            num_scalar_prefetch=0,
            grid=(B, Hk, nq, nkv),
            in_specs=[
                pl.BlockSpec((1, 1, block_q, D),
                             lambda b, h, qi, kv: (b, h, qi, 0)),
                pl.BlockSpec((1, 1, block_kv, D),
                             lambda b, h, qi, kv: (b, h, kv, 0)),
                pl.BlockSpec((1, 1, block_kv, D),
                             lambda b, h, qi, kv: (b, h, kv, 0)),
            ],
            out_specs=pl.BlockSpec((1, 1, block_q, D),
                                   lambda b, h, qi, kv: (b, h, qi, 0)),
            scratch_shapes=[
                pltpu.VMEM((block_q, 1), jnp.float32),   # running max m
                pltpu.VMEM((block_q, 1), jnp.float32),   # running denom l
                pltpu.VMEM((block_q, D), jnp.float32),   # output accumulator
            ],
        ),
        compiler_params=pltpu.CompilerParams(
            dimension_semantics=("parallel", "parallel", "parallel",
                                 "arbitrary"),
            vmem_limit_bytes=vmem_limit,
        ),
        cost_estimate=cost,
    )(qf, k, v)

    # 'b h (g n) d' -> 'b (h g) n d'  == original head ordering.
    return out.reshape(B, Hq, Sq, D)


def gqa_attention_ref(q, k, v):
    """Pure-JAX reference mirroring the PyTorch module exactly."""
    B, Hq, Sq, D = q.shape
    Hk, Skv = k.shape[1], k.shape[2]
    g = Hq // Hk
    scale = 1.0 / math.sqrt(D)
    # 'b (h g) n d -> b g h n d'
    qr = q.reshape(B, Hk, g, Sq, D).transpose(0, 2, 1, 3, 4).astype(jnp.float32)
    kf = k.astype(jnp.float32)
    vf = v.astype(jnp.float32)
    qk = jnp.einsum("bghnd,bhsd->bghns", qr, kf)
    mask = jnp.triu(jnp.full((Sq, Skv), -jnp.inf, dtype=jnp.float32), 1)
    qk = qk + mask
    attn = jax.nn.softmax(qk * scale, axis=-1)
    o = jnp.einsum("bghns,bhsd->bghnd", attn, vf)
    # 'b g h n d -> b (h g) n d'
    o = o.transpose(0, 2, 1, 3, 4).reshape(B, Hq, Sq, D)
    return o.astype(q.dtype)


if __name__ == "__main__":
    # Small shapes consistent with the module (torch fp16 -> bf16 on TPU).
    batch, nheads, nheads_k = 2, 4, 2
    seqlen_q, seqlen_kv, dim_qk = 16, 32, 32
    dtype = jnp.bfloat16

    key = jax.random.PRNGKey(0)
    kq, kk, kvk = jax.random.split(key, 3)
    q = jax.random.normal(kq, (batch, nheads, seqlen_q, dim_qk), dtype=dtype)
    k = jax.random.normal(kk, (batch, nheads_k, seqlen_kv, dim_qk), dtype=dtype)
    v = jax.random.normal(kvk, (batch, nheads_k, seqlen_kv, dim_qk), dtype=dtype)

    ref = gqa_attention_ref(q, k, v)

    # Explicit small tiles: exercises q-tiling (nq=4), causal KV-range pruning
    # (keys >= Sq never fetched), causal block skipping (q tiles covering
    # positions 0..7 skip the 2nd KV block) and the multi-block online softmax
    # (q tiles covering positions 8..15 see two KV blocks).
    out = gqa_attention(q, k, v, causal=True, block_q=8, block_kv=8)
    out = jax.block_until_ready(out)
    assert out.shape == (batch, nheads, seqlen_q, dim_qk)
    assert jnp.allclose(out.astype(jnp.float32), ref.astype(jnp.float32),
                        atol=2e-2, rtol=2e-2), "mismatch (explicit tiles)"

    # Auto tile-selection path (single q tile, single pruned KV block here).
    out2 = jax.block_until_ready(gqa_attention(q, k, v, causal=True))
    assert jnp.allclose(out2.astype(jnp.float32), ref.astype(jnp.float32),
                        atol=2e-2, rtol=2e-2), "mismatch (auto tiles)"

    print("KERNEL_OK")
</pallas_src>

<mosaic_0001>
module attributes {stable_mosaic.version = 11 : i64} {
  func.func @_flash_gqa_kernel(%arg0: i32, %arg1: i32, %arg2: i32, %arg3: i32, %arg4: memref<1x1x8x32xbf16, #tpu.memory_space<vmem>>, %arg5: memref<1x1x8x32xbf16, #tpu.memory_space<vmem>>, %arg6: memref<1x1x8x32xbf16, #tpu.memory_space<vmem>>, %arg7: memref<1x1x8x32xbf16, #tpu.memory_space<vmem>>, %arg8: memref<8x1xf32, #tpu.memory_space<vmem>>, %arg9: memref<8x1xf32, #tpu.memory_space<vmem>>, %arg10: memref<8x32xf32, #tpu.memory_space<vmem>>) attributes {dimension_semantics = [#tpu.dimension_semantics<parallel>, #tpu.dimension_semantics<parallel>, #tpu.dimension_semantics<parallel>, #tpu.dimension_semantics<arbitrary>], iteration_bounds = array<i64: 2, 2, 4, 2>, scalar_prefetch = 0 : i64, scratch_operands = 3 : i64, tpu.core_type = #tpu.core_type<tc>, window_params = [{transform_indices = @transform_0, window_bounds = array<i64: 1, 1, 8, 32>}, {transform_indices = @transform_1, window_bounds = array<i64: 1, 1, 8, 32>}, {transform_indices = @transform_2, window_bounds = array<i64: 1, 1, 8, 32>}, {transform_indices = @transform_3, window_bounds = array<i64: 1, 1, 8, 32>}]} {
    %c0_i32 = arith.constant 0 : i32
    %0 = arith.cmpi eq, %arg3, %c0_i32 : i32
    %1 = arith.extui %0 : i1 to i32
    %c0_i32_0 = arith.constant 0 : i32
    %2 = arith.cmpi ne, %1, %c0_i32_0 : i32
    scf.if %2 {
      %cst = arith.constant 0xFF800000 : f32
      %22 = vector.broadcast %cst : f32 to vector<8x1xf32>
      %c0 = arith.constant 0 : index
      %c0_9 = arith.constant 0 : index
      %23 = vector.load %arg8[%c0, %c0_9] : memref<8x1xf32, #tpu.memory_space<vmem>>, vector<8x1xf32>
      tpu.vector_store %arg8[%c0, %c0_9], %22 {strides = array<i32>} : memref<8x1xf32, #tpu.memory_space<vmem>>, vector<8x1xf32>,
      %cst_10 = arith.constant 0.000000e+00 : f32
      %24 = vector.broadcast %cst_10 : f32 to vector<8x1xf32>
      %c0_11 = arith.constant 0 : index
      %c0_12 = arith.constant 0 : index
      %25 = vector.load %arg9[%c0_11, %c0_12] : memref<8x1xf32, #tpu.memory_space<vmem>>, vector<8x1xf32>
      tpu.vector_store %arg9[%c0_11, %c0_12], %24 {strides = array<i32>} : memref<8x1xf32, #tpu.memory_space<vmem>>, vector<8x1xf32>,
      %cst_13 = arith.constant 0.000000e+00 : f32
      %26 = vector.broadcast %cst_13 : f32 to vector<8x32xf32>
      %c0_14 = arith.constant 0 : index
      %c0_15 = arith.constant 0 : index
      %27 = vector.load %arg10[%c0_14, %c0_15] : memref<8x32xf32, #tpu.memory_space<vmem>>, vector<8x32xf32>
      tpu.vector_store %arg10[%c0_14, %c0_15], %26 {strides = array<i32>} : memref<8x32xf32, #tpu.memory_space<vmem>>, vector<8x32xf32>,
    } else {
    }
    %c8_i32 = arith.constant 8 : i32
    %3 = arith.muli %arg2, %c8_i32 : i32
    %c8_i32_1 = arith.constant 8 : i32
    %4 = arith.muli %arg3, %c8_i32_1 : i32
    %c16_i32 = arith.constant 16 : i32
    %c0_i32_2 = arith.constant 0 : i32
    %5 = arith.cmpi eq, %c16_i32, %c0_i32_2 : i32
    %c1_i32 = arith.constant 1 : i32
    %6 = arith.select %5, %c1_i32, %c16_i32 : i32
    %7 = arith.remsi %3, %6 : i32
    %c0_i32_3 = arith.constant 0 : i32
    %8 = arith.cmpi ne, %7, %c0_i32_3 : i32
    %c0_i32_4 = arith.constant 0 : i32
    %9 = arith.cmpi slt, %7, %c0_i32_4 : i32
    %c0_i32_5 = arith.constant 0 : i32
    %10 = arith.cmpi slt, %6, %c0_i32_5 : i32
    %11 = arith.xori %9, %10 : i1
    %12 = arith.andi %11, %8 : i1
    %13 = arith.addi %7, %6 : i32
    %14 = arith.select %12, %13, %7 : i32
    %c7_i32 = arith.constant 7 : i32
    %15 = arith.addi %14, %c7_i32 : i32
    %16 = arith.cmpi sle, %4, %15 : i32
    %17 = arith.extui %16 : i1 to i32
    %c0_i32_6 = arith.constant 0 : i32
    %18 = arith.cmpi ne, %17, %c0_i32_6 : i32
    scf.if %18 {
      %c0 = arith.constant 0 : index
      %c0_9 = arith.constant 0 : index
      %c0_10 = arith.constant 0 : index
      %c0_11 = arith.constant 0 : index
      %22 = vector.load %arg4[%c0, %c0_9, %c0_10, %c0_11] : memref<1x1x8x32xbf16, #tpu.memory_space<vmem>>, vector<1x1x8x32xbf16>
      %23 = vector.shape_cast %22 : vector<1x1x8x32xbf16> to vector<8x32xbf16>
      %c0_12 = arith.constant 0 : index
      %c0_13 = arith.constant 0 : index
      %c0_14 = arith.constant 0 : index
      %c0_15 = arith.constant 0 : index
      %24 = vector.load %arg5[%c0_12, %c0_13, %c0_14, %c0_15] : memref<1x1x8x32xbf16, #tpu.memory_space<vmem>>, vector<1x1x8x32xbf16>
      %25 = vector.shape_cast %24 : vector<1x1x8x32xbf16> to vector<8x32xbf16>
      %c0_16 = arith.constant 0 : index
      %c0_17 = arith.constant 0 : index
      %c0_18 = arith.constant 0 : index
      %c0_19 = arith.constant 0 : index
      %26 = vector.load %arg6[%c0_16, %c0_17, %c0_18, %c0_19] : memref<1x1x8x32xbf16, #tpu.memory_space<vmem>>, vector<1x1x8x32xbf16>
      %27 = vector.shape_cast %26 : vector<1x1x8x32xbf16> to vector<8x32xbf16>
      %cst = arith.constant dense<0.000000e+00> : vector<8x8xf32>
      %28 = tpu.matmul %23, %25, %cst {dimension_numbers = #tpu.dot_dimension_numbers<[1], [1], [0], [0], [0, 0, 1, 0], [], []>} : vector<8x32xbf16>, vector<8x32xbf16>, vector<8x8xf32> -> vector<8x8xf32>
      %cst_20 = arith.constant 0.176776692 : f32
      %29 = vector.broadcast %cst_20 : f32 to vector<8x8xf32>
      %30 = arith.mulf %28, %29 : vector<8x8xf32>
      %31 = tpu.iota {dimensions = array<i32: 0>} : vector<8x1xi32>
      %32 = vector.broadcast %3 : i32 to vector<8x1xi32>
      %33 = arith.addi %32, %31 : vector<8x1xi32>
      %c16_i32_21 = arith.constant 16 : i32
      %c0_i32_22 = arith.constant 0 : i32
      %34 = arith.cmpi eq, %c16_i32_21, %c0_i32_22 : i32
      %c1_i32_23 = arith.constant 1 : i32
      %35 = arith.select %34, %c1_i32_23, %c16_i32_21 : i32
      %36 = vector.broadcast %35 : i32 to vector<8x1xi32>
      %37 = arith.remsi %33, %36 : vector<8x1xi32>
      %c0_i32_24 = arith.constant 0 : i32
      %38 = vector.broadcast %c0_i32_24 : i32 to vector<8x1xi32>
      %39 = arith.cmpi ne, %37, %38 : vector<8x1xi32>
      %c0_i32_25 = arith.constant 0 : i32
      %40 = vector.broadcast %c0_i32_25 : i32 to vector<8x1xi32>
      %41 = arith.cmpi slt, %37, %40 : vector<8x1xi32>
      %c0_i32_26 = arith.constant 0 : i32
      %42 = arith.cmpi slt, %35, %c0_i32_26 : i32
      %43 = vector.broadcast %42 : i1 to vector<8x1xi1>
      %44 = vector.broadcast %43 : vector<8x1xi1> to vector<8x1xi1>
      %45 = arith.xori %41, %44 : vector<8x1xi1>
      %46 = arith.andi %45, %39 : vector<8x1xi1>
      %47 = vector.broadcast %35 : i32 to vector<8x1xi32>
      %48 = arith.addi %37, %47 : vector<8x1xi32>
      %49 = arith.select %46, %48, %37 : vector<8x1xi1>, vector<8x1xi32>
      %50 = tpu.iota {dimensions = array<i32: 1>} : vector<1x8xi32>
      %51 = vector.broadcast %4 : i32 to vector<1x8xi32>
      %52 = arith.addi %51, %50 : vector<1x8xi32>
      %53 = vector.broadcast %52 : vector<1x8xi32> to vector<8x8xi32>
      %54 = vector.broadcast %49 : vector<8x1xi32> to vector<8x8xi32>
      %55 = arith.cmpi sgt, %53, %54 : vector<8x8xi32>
      %cst_27 = arith.constant 0xFF800000 : f32
      %56 = vector.broadcast %cst_27 : f32 to vector<8x8xf32>
      %57 = arith.select %55, %56, %30 : vector<8x8xi1>, vector<8x8xf32>
      %c0_28 = arith.constant 0 : index
      %c0_29 = arith.constant 0 : index
      %58 = vector.load %arg8[%c0_28, %c0_29] : memref<8x1xf32, #tpu.memory_space<vmem>>, vector<8x1xf32>
      %cst_30 = arith.constant dense<0xFF800000> : vector<8xf32>
      %59 = vector.multi_reduction <maximumf>, %57, %cst_30 [1] : vector<8x8xf32> to vector<8xf32>
      %60 = vector.shape_cast %59 : vector<8xf32> to vector<8x1xf32>
      %61 = arith.maximumf %58, %60 : vector<8x1xf32>
      %62 = arith.subf %58, %61 : vector<8x1xf32>
      %63 = math.exp %62 : vector<8x1xf32>
      %64 = vector.broadcast %61 : vector<8x1xf32> to vector<8x8xf32>
      %65 = arith.subf %57, %64 : vector<8x8xf32>
      %66 = math.exp %65 : vector<8x8xf32>
      %c0_31 = arith.constant 0 : index
      %c0_32 = arith.constant 0 : index
      %67 = vector.load %arg9[%c0_31, %c0_32] : memref<8x1xf32, #tpu.memory_space<vmem>>, vector<8x1xf32>
      %68 = arith.mulf %63, %67 : vector<8x1xf32>
      %cst_33 = arith.constant dense<0.000000e+00> : vector<8xf32>
      %69 = vector.multi_reduction <add>, %66, %cst_33 [1] : vector<8x8xf32> to vector<8xf32>
      %70 = vector.shape_cast %69 : vector<8xf32> to vector<8x1xf32>
      %71 = arith.addf %68, %70 : vector<8x1xf32>
      %c0_34 = arith.constant 0 : index
      %c0_35 = arith.constant 0 : index
      %72 = vector.load %arg9[%c0_34, %c0_35] : memref<8x1xf32, #tpu.memory_space<vmem>>, vector<8x1xf32>
      tpu.vector_store %arg9[%c0_34, %c0_35], %71 {strides = array<i32>} : memref<8x1xf32, #tpu.memory_space<vmem>>, vector<8x1xf32>,
      %c0_36 = arith.constant 0 : index
      %c0_37 = arith.constant 0 : index
      %73 = vector.load %arg10[%c0_36, %c0_37] : memref<8x32xf32, #tpu.memory_space<vmem>>, vector<8x32xf32>
      %74 = vector.broadcast %63 : vector<8x1xf32> to vector<8x32xf32>
      %75 = arith.mulf %74, %73 : vector<8x32xf32>
      %76 = arith.truncf %66 : vector<8x8xf32> to vector<8x8xbf16>
      %cst_38 = arith.constant dense<0.000000e+00> : vector<8x32xf32>
      %77 = tpu.matmul %76, %27, %cst_38 {dimension_numbers = #tpu.dot_dimension_numbers<[1], [0], [0], [1], [0, 0, 1, 1], [], []>} : vector<8x8xbf16>, vector<8x32xbf16>, vector<8x32xf32> -> vector<8x32xf32>
      %78 = arith.addf %75, %77 : vector<8x32xf32>
      %c0_39 = arith.constant 0 : index
      %c0_40 = arith.constant 0 : index
      %79 = vector.load %arg10[%c0_39, %c0_40] : memref<8x32xf32, #tpu.memory_space<vmem>>, vector<8x32xf32>
      tpu.vector_store %arg10[%c0_39, %c0_40], %78 {strides = array<i32>} : memref<8x32xf32, #tpu.memory_space<vmem>>, vector<8x32xf32>,
      %c0_41 = arith.constant 0 : index
      %c0_42 = arith.constant 0 : index
      %80 = vector.load %arg8[%c0_41, %c0_42] : memref<8x1xf32, #tpu.memory_space<vmem>>, vector<8x1xf32>
      tpu.vector_store %arg8[%c0_41, %c0_42], %61 {strides = array<i32>} : memref<8x1xf32, #tpu.memory_space<vmem>>, vector<8x1xf32>,
    } else {
    }
    %c1_i32_7 = arith.constant 1 : i32
    %19 = arith.cmpi eq, %arg3, %c1_i32_7 : i32
    %20 = arith.extui %19 : i1 to i32
    %c0_i32_8 = arith.constant 0 : i32
    %21 = arith.cmpi ne, %20, %c0_i32_8 : i32
    scf.if %21 {
      %c0 = arith.constant 0 : index
      %c0_9 = arith.constant 0 : index
      %22 = vector.load %arg9[%c0, %c0_9] : memref<8x1xf32, #tpu.memory_space<vmem>>, vector<8x1xf32>
      %23 = tpu.reciprocal %22 {approx = true} : vector<8x1xf32> -> vector<8x1xf32>
      %c0_10 = arith.constant 0 : index
      %c0_11 = arith.constant 0 : index
      %24 = vector.load %arg10[%c0_10, %c0_11] : memref<8x32xf32, #tpu.memory_space<vmem>>, vector<8x32xf32>
      %25 = vector.broadcast %23 : vector<8x1xf32> to vector<8x32xf32>
      %26 = arith.mulf %24, %25 : vector<8x32xf32>
      %27 = arith.truncf %26 : vector<8x32xf32> to vector<8x32xbf16>
      %c0_12 = arith.constant 0 : index
      %c0_13 = arith.constant 0 : index
      %c0_14 = arith.constant 0 : index
      %c0_15 = arith.constant 0 : index
      %28 = vector.load %arg7[%c0_12, %c0_13, %c0_14, %c0_15] : memref<1x1x8x32xbf16, #tpu.memory_space<vmem>>, vector<1x1x8x32xbf16>
      %29 = vector.shape_cast %28 : vector<1x1x8x32xbf16> to vector<8x32xbf16>
      %30 = vector.shape_cast %27 : vector<8x32xbf16> to vector<1x1x8x32xbf16>
      tpu.vector_store %arg7[%c0_12, %c0_13, %c0_14, %c0_15], %30 {strides = array<i32>} : memref<1x1x8x32xbf16, #tpu.memory_space<vmem>>, vector<1x1x8x32xbf16>,
    } else {
    }
    return
  }
  func.func @transform_0(%arg0: i32, %arg1: i32, %arg2: i32, %arg3: i32) -> (i32, i32, i32, i32) {
    %c0_i32 = arith.constant 0 : i32
    %c0_i32_0 = arith.constant 0 : i32
    return %arg0, %arg1, %arg2, %c0_i32 : i32, i32, i32, i32
  }
  func.func @transform_1(%arg0: i32, %arg1: i32, %arg2: i32, %arg3: i32) -> (i32, i32, i32, i32) {
    %c0_i32 = arith.constant 0 : i32
    %c0_i32_0 = arith.constant 0 : i32
    return %arg0, %arg1, %arg3, %c0_i32 : i32, i32, i32, i32
  }
  func.func @transform_2(%arg0: i32, %arg1: i32, %arg2: i32, %arg3: i32) -> (i32, i32, i32, i32) {
    %c0_i32 = arith.constant 0 : i32
    %c0_i32_0 = arith.constant 0 : i32
    return %arg0, %arg1, %arg3, %c0_i32 : i32, i32, i32, i32
  }
  func.func @transform_3(%arg0: i32, %arg1: i32, %arg2: i32, %arg3: i32) -> (i32, i32, i32, i32) {
    %c0_i32 = arith.constant 0 : i32
    %c0_i32_0 = arith.constant 0 : i32
    return %arg0, %arg1, %arg2, %c0_i32 : i32, i32, i32, i32
  }
}

</mosaic_0001>

<llo_original>
// kernel: tpu_custom_call.1
$region0: #{tpu_custom_call.1}
  #allocation0 [shape = 'u32[]', space=smem, size = 0x4, offset = 0x4, fixed_abs, tag = 'smem constant byte address 0x4 - core index']
  #allocation1 [shape = 'u32[144,128]{1,0:T(1,128)}', space=vmem, size = 0x12000, scoped, tag = 'internal scratch']
  #allocation2 [shape = 'f32[8,1]{1,0:T(8,128)}', space=vmem, size = 0x1000, scoped, tag = 'scratch operand']
  #allocation3 [shape = 'f32[8,1]{1,0:T(8,128)}', space=vmem, size = 0x1000, scoped, tag = 'scratch operand']
  #allocation4 [shape = 'f32[8,32]{1,0:T(8,128)}', space=vmem, size = 0x1000, scoped, tag = 'scratch operand']
  %s0 = inlined_call_operand.hbm [shape: bf16[2,2,32,32], index: 0, kind: input, shape index: {}]
  %s1 = inlined_call_operand.hbm [shape: bf16[2,2,32,32], index: 1, kind: input, shape index: {}]
  %s2 = inlined_call_operand.hbm [shape: bf16[2,2,32,32], index: 2, kind: input, shape index: {}]
  %s3 = inlined_call_operand.hbm [shape: bf16[2,2,32,32], index: 3, kind: output, shape index: {}]
  %s4 = sld [smem:[#allocation0]]
  $region69: #{tpu_custom_call.1} parent=0
    _
  %s6 = ssub.s32 1, %s4
  %s7 = scalar_select 0, %s6, %s4
  $region1: #{tpu_custom_call.1} parent=0
    #allocation5 [shape = 'u8[4096]{0}', space=vmem, size = 0x1000, scoped, tag = 'input window, operand 0']
    #allocation6 [shape = 's32[2]{0}', space=sflag, size = 0x8, scoped, tag = 'scoped memory for tpu_custom_call.1']
    #allocation7 [shape = 's32[2]{0}', space=sflag, size = 0x8, scoped, tag = 'scoped memory for tpu_custom_call.1']
    #allocation8 [shape = 'u8[4096]{0}', space=vmem, size = 0x1000, scoped, tag = 'input window, operand 1']
    #allocation9 [shape = 's32[2]{0}', space=sflag, size = 0x8, scoped, tag = 'scoped memory for tpu_custom_call.1']
    #allocation10 [shape = 'u8[4096]{0}', space=vmem, size = 0x1000, scoped, tag = 'input window, operand 2']
    #allocation11 [shape = 'u8[4096]{0}', space=vmem, size = 0x1000, scoped, tag = 'output window, operand 0']
    %8 = vsyncpa [#allocation6], 0
    %s9 = scalar_lea.sflag [#allocation6], 1
    %10 = vsyncpa %s9, 0
    %11 = vsyncpa [#allocation9], 0
    %s12 = scalar_lea.sflag [#allocation9], 1
    %13 = vsyncpa %s12, 0
    %14 = vsyncpa [#allocation7], 0
    %s15 = scalar_lea.sflag [#allocation7], 1
    %16 = vsyncpa %s15, 0
    loop: start=0, step=1, limit=34
    $region2: #{tpu_custom_call.1} parent=1 // loop_pre_header
      _
    $region3: #{tpu_custom_call.1} parent=1 // loop_header
      %s18 = sphi 0, %s22
      %p19 = scmp.ge.s32.totalorder %s18, 34
      %s25 = sphi 0, %s51
      %s26 = sphi 0, %s47
      %s27 = sphi 0, %s43
      %s28 = sphi 0, %s39
      %s29 = sphi 0, %s25
      %s30 = sphi 0, %s26
      %s31 = sphi 0, %s27
      %s32 = sphi 0, %s28
      %s33 = sphi 0, %s29
      %s34 = sphi 0, %s30
      %s35 = sphi 0, %s31
      %s36 = sphi 0, %s32
      %s58 = sphi 0, %s60
      %s61 = sphi 0, %s58
      %s62 = sphi 0, %s61
      %s78 = sphi 0, %s62
      %s88 = sphi 0, %s90
      %s91 = sphi 0, %s88
      %s92 = sphi 0, %s91
      %s108 = sphi 0, %s92
      %s118 = sphi 0, %s120
      %s121 = sphi 0, %s118
      %s122 = sphi 0, %s121
      %s138 = sphi 0, %s122
      %s148 = sphi 0, %s150
      %s151 = sphi 0, %s148
      %s152 = sphi 0, %s151
      %s168 = sphi 0, %s152
    $region4: #{tpu_custom_call.1} parent=1 // loop_header_branch
      %21 = sbr.rel (%p19) target = $region8
    $region5: #{tpu_custom_call.1} parent=1 // loop_body
      %s23 = ssub.s32 %s18, 1
      %s24 = ssub.s32 %s18, 2
      %s37 = sadd.s32 1, %s28
      %p38 = scmp.ge.s32.totalorder %s37, 2
      %s39 = scalar_select %p38, 0, %s37
      %s40 = sadd.s32 1, %s27
      %s41 = scalar_select %p38, %s40, %s27
      %p42 = scmp.ge.s32.totalorder %s41, 4
      %s43 = scalar_select %p42, 0, %s41
      %s44 = sadd.s32 1, %s26
      %s45 = scalar_select %p42, %s44, %s26
      %p46 = scmp.ge.s32.totalorder %s45, 2
      %s47 = scalar_select %p46, 0, %s45
      %s48 = sadd.s32 1, %s25
      %s49 = scalar_select %p46, %s48, %s25
      %p50 = scmp.ge.s32.totalorder %s49, 2
      %s51 = scalar_select %p50, 0, %s49
      %s52 = ssub.s32 %s25, %s51
      %s53 = ssub.s32 %s26, %s47
      %s54 = sor.u32 %s52, %s53
      %s55 = ssub.s32 %s27, %s43
      %s56 = sor.u32 %s54, %s55
      %p57 = scmp.eq.s32.totalorder %s56, 0
      %s59 = sadd.s32 %s58, 1
      %s60 = scalar_select %p57, %s58, %s59
      %p63 = pneg %p57
      %p64 = scmp.eq.s32.totalorder %s18, 31
      %p65 = por %p63, %p64
      %p66 = scmp.ne.s32.totalorder %s58, %s61
      %p67 = scmp.eq.s32.totalorder %s18, 0
      %p68 = por %p66, %p67
      %p69 = scmp.ne.s32.totalorder %s58, %s61
      %p70 = scmp.eq.s32.totalorder %s23, 31
      %p71 = por %p69, %p70
      %p72 = scmp.ne.s32.totalorder %s61, %s62
      %p73 = scmp.eq.s32.totalorder %s23, 0
      %p74 = por %p72, %p73
      %p75 = scmp.ne.s32.totalorder %s61, %s62
      %p76 = scmp.eq.s32.totalorder %s24, 31
      %p77 = por %p75, %p76
      %p79 = scmp.ne.s32.totalorder %s62, %s78
      %p80 = scmp.eq.s32.totalorder %s24, 0
      %p81 = por %p79, %p80
      %s82 = ssub.s32 %s25, %s51
      %s83 = ssub.s32 %s26, %s47
      %s84 = sor.u32 %s82, %s83
      %s85 = ssub.s32 %s28, %s39
      %s86 = sor.u32 %s84, %s85
      %p87 = scmp.eq.s32.totalorder %s86, 0
      %s89 = sadd.s32 %s88, 1
      %s90 = scalar_select %p87, %s88, %s89
      %p93 = pneg %p87
      %p94 = scmp.eq.s32.totalorder %s18, 31
      %p95 = por %p93, %p94
      %p96 = scmp.ne.s32.totalorder %s88, %s91
      %p97 = scmp.eq.s32.totalorder %s18, 0
      %p98 = por %p96, %p97
      %p99 = scmp.ne.s32.totalorder %s88, %s91
      %p100 = scmp.eq.s32.totalorder %s23, 31
      %p101 = por %p99, %p100
      %p102 = scmp.ne.s32.totalorder %s91, %s92
      %p103 = scmp.eq.s32.totalorder %s23, 0
      %p104 = por %p102, %p103
      %p105 = scmp.ne.s32.totalorder %s91, %s92
      %p106 = scmp.eq.s32.totalorder %s24, 31
      %p107 = por %p105, %p106
      %p109 = scmp.ne.s32.totalorder %s92, %s108
      %p110 = scmp.eq.s32.totalorder %s24, 0
      %p111 = por %p109, %p110
      %s112 = ssub.s32 %s25, %s51
      %s113 = ssub.s32 %s26, %s47
      %s114 = sor.u32 %s112, %s113
      %s115 = ssub.s32 %s28, %s39
      %s116 = sor.u32 %s114, %s115
      %p117 = scmp.eq.s32.totalorder %s116, 0
      %s119 = sadd.s32 %s118, 1
      %s120 = scalar_select %p117, %s118, %s119
      %p123 = pneg %p117
      %p124 = scmp.eq.s32.totalorder %s18, 31
      %p125 = por %p123, %p124
      %p126 = scmp.ne.s32.totalorder %s118, %s121
      %p127 = scmp.eq.s32.totalorder %s18, 0
      %p128 = por %p126, %p127
      %p129 = scmp.ne.s32.totalorder %s118, %s121
      %p130 = scmp.eq.s32.totalorder %s23, 31
      %p131 = por %p129, %p130
      %p132 = scmp.ne.s32.totalorder %s121, %s122
      %p133 = scmp.eq.s32.totalorder %s23, 0
      %p134 = por %p132, %p133
      %p135 = scmp.ne.s32.totalorder %s121, %s122
      %p136 = scmp.eq.s32.totalorder %s24, 31
      %p137 = por %p135, %p136
      %p139 = scmp.ne.s32.totalorder %s122, %s138
      %p140 = scmp.eq.s32.totalorder %s24, 0
      %p141 = por %p139, %p140
      %s142 = ssub.s32 %s25, %s51
      %s143 = ssub.s32 %s26, %s47
      %s144 = sor.u32 %s142, %s143
      %s145 = ssub.s32 %s27, %s43
      %s146 = sor.u32 %s144, %s145
      %p147 = scmp.eq.s32.totalorder %s146, 0
      %s149 = sadd.s32 %s148, 1
      %s150 = scalar_select %p147, %s148, %s149
      %p153 = pneg %p147
      %p154 = scmp.eq.s32.totalorder %s18, 31
      %p155 = por %p153, %p154
      %p156 = scmp.ne.s32.totalorder %s148, %s151
      %p157 = scmp.eq.s32.totalorder %s18, 0
      %p158 = por %p156, %p157
      %p159 = scmp.ne.s32.totalorder %s148, %s151
      %p160 = scmp.eq.s32.totalorder %s23, 31
      %p161 = por %p159, %p160
      %p162 = scmp.ne.s32.totalorder %s151, %s152
      %p163 = scmp.eq.s32.totalorder %s23, 0
      %p164 = por %p162, %p163
      %p165 = scmp.ne.s32.totalorder %s151, %s152
      %p166 = scmp.eq.s32.totalorder %s24, 31
      %p167 = por %p165, %p166
      %p169 = scmp.ne.s32.totalorder %s152, %s168
      %p170 = scmp.eq.s32.totalorder %s24, 0
      %p171 = por %p169, %p170
      %p172 = scmp.le.s32.totalorder 1, %s18
      %p173 = scmp.lt.s32.totalorder %s18, 33
      %p174 = pnand %p172, %p173
      %p175 = pneg %p174
      // Predicated region
      $region9: #{tpu_custom_call.1} parent=5 // pred_check
        _
      $region10: #{tpu_custom_call.1} parent=5 // pred_check_branch
        %177 = sbr.rel (%p174) target = $region12
      $region11: #{tpu_custom_call.1} parent=5 // pred_region
        %s178 = ssub.s32 %s18, 1
      $region12: #{tpu_custom_call.1} parent=5 // pred_fallthru
        _
      %p179 = scmp.lt.s32.totalorder %s18, 32
      // Predicated region
      $region13: #{tpu_custom_call.1} parent=5 // pred_check
        %p180 = pneg %p179
      $region14: #{tpu_custom_call.1} parent=5 // pred_check_branch
        %182 = sbr.rel (%p180) target = $region16
      $region15: #{tpu_custom_call.1} parent=5 // pred_region
        // Predicated region
        $region17: #{tpu_custom_call.1} parent=15 // pred_check
          %p183 = pneg %p68
        $region18: #{tpu_custom_call.1} parent=15 // pred_check_branch
          %185 = sbr.rel (%p183) target = $region20
        $region19: #{tpu_custom_call.1} parent=15 // pred_region
          %s186 = sand.u32 %s58, 1
          %s187 = scalar_lea.sflag [#allocation6], %s186
          %s188 = sand.u32 %s58, 1
          %s189 = smul.addr %s188, 4
          %s190 = scalar_lea.vmem [#allocation5], %s189
          %s192 = ssub.s32 64, 64
          %193 = vsyncadd %s187, %s192
          %s194 = smul.addr %s26, 4
          %s195 = sadd.s32 %s27, %s194
          %s196 = smul.addr %s25, 8
          %s197 = sadd.s32 %s195, %s196
          %s198 = smul.addr %s197, 64
          %s199 = scalar_lea.hbm %s0, %s198
          %s201 = sshll.u32 %s190, 4
          %s202 = int_to_ptr.vmem [resolvable:$true] %s201
          %204 = dma.hbm_to_vmem [thread:$0]  %s199, 64, %s202, %s187
        $region20: #{tpu_custom_call.1} parent=15 // pred_fallthru
          _
        // Predicated region
        $region21: #{tpu_custom_call.1} parent=15 // pred_check
          %p205 = pneg %p98
        $region22: #{tpu_custom_call.1} parent=15 // pred_check_branch
          %207 = sbr.rel (%p205) target = $region24
        $region23: #{tpu_custom_call.1} parent=15 // pred_region
          %s208 = sand.u32 %s18, 1
          %s209 = scalar_lea.sflag [#allocation9], %s208
          %s210 = sand.u32 %s88, 1
          %s211 = smul.addr %s210, 4
          %s212 = scalar_lea.vmem [#allocation8], %s211
          %s214 = ssub.s32 64, 64
          %215 = vsyncadd %s209, %s214
          %s216 = smul.addr %s26, 4
          %s217 = sadd.s32 %s28, %s216
          %s218 = smul.addr %s25, 8
          %s219 = sadd.s32 %s217, %s218
          %s220 = smul.addr %s219, 64
          %s221 = scalar_lea.hbm %s1, %s220
          %s223 = sshll.u32 %s212, 4
          %s224 = int_to_ptr.vmem [resolvable:$true] %s223
          %226 = dma.hbm_to_vmem [thread:$0]  %s221, 64, %s224, %s209
        $region24: #{tpu_custom_call.1} parent=15 // pred_fallthru
          _
        // Predicated region
        $region25: #{tpu_custom_call.1} parent=15 // pred_check
          %p227 = pneg %p128
        $region26: #{tpu_custom_call.1} parent=15 // pred_check_branch
          %229 = sbr.rel (%p227) target = $region28
        $region27: #{tpu_custom_call.1} parent=15 // pred_region
          %s230 = sand.u32 %s18, 1
          %s231 = scalar_lea.sflag [#allocation9], %s230
          %s232 = sand.u32 %s118, 1
          %s233 = smul.addr %s232, 4
          %s234 = scalar_lea.vmem [#allocation10], %s233
          %s236 = ssub.s32 64, 64
          %237 = vsyncadd %s231, %s236
          %s238 = smul.addr %s26, 4
          %s239 = sadd.s32 %s28, %s238
          %s240 = smul.addr %s25, 8
          %s241 = sadd.s32 %s239, %s240
          %s242 = smul.addr %s241, 64
          %s243 = scalar_lea.hbm %s2, %s242
          %s245 = sshll.u32 %s234, 4
          %s246 = int_to_ptr.vmem [resolvable:$true] %s245
          %248 = dma.hbm_to_vmem [thread:$0]  %s243, 64, %s246, %s231
        $region28: #{tpu_custom_call.1} parent=15 // pred_fallthru
          _
      $region16: #{tpu_custom_call.1} parent=5 // pred_fallthru
        _
      %p249 = scmp.le.s32.totalorder 1, %s18
      %p250 = scmp.lt.s32.totalorder %s18, 33
      %p251 = pnand %p249, %p250
      %p252 = pneg %p251
      // Predicated region
      $region29: #{tpu_custom_call.1} parent=5 // pred_check
        _
      $region30: #{tpu_custom_call.1} parent=5 // pred_check_branch
        %254 = sbr.rel (%p251) target = $region32
      $region31: #{tpu_custom_call.1} parent=5 // pred_region
        %s255 = ssub.s32 %s18, 1
        %s256 = sand.u32 %s61, 1
        %s257 = scalar_lea.sflag [#allocation6], %s256
        %s258 = sand.u32 %s61, 1
        %s259 = smul.addr %s258, 4
        %s260 = scalar_lea.vmem [#allocation5], %s259
        // Predicated region
        $region33: #{tpu_custom_call.1} parent=31 // pred_check
          %p261 = pneg %p74
        $region34: #{tpu_custom_call.1} parent=31 // pred_check_branch
          %263 = sbr.rel (%p261) target = $region36
        $region35: #{tpu_custom_call.1} parent=31 // pred_region
          %264 = dma.done %s257, 64
        $region36: #{tpu_custom_call.1} parent=31 // pred_fallthru
          _
        %s265 = sand.u32 %s23, 1
        %s266 = scalar_lea.sflag [#allocation9], %s265
        %s267 = sand.u32 %s91, 1
        %s268 = smul.addr %s267, 4
        %s269 = scalar_lea.vmem [#allocation8], %s268
        // Predicated region
        $region37: #{tpu_custom_call.1} parent=31 // pred_check
          %p270 = pneg %p104
        $region38: #{tpu_custom_call.1} parent=31 // pred_check_branch
          %272 = sbr.rel (%p270) target = $region40
        $region39: #{tpu_custom_call.1} parent=31 // pred_region
          %273 = dma.done %s266, 64
        $region40: #{tpu_custom_call.1} parent=31 // pred_fallthru
          _
        %s274 = sand.u32 %s23, 1
        %s275 = scalar_lea.sflag [#allocation9], %s274
        %s276 = sand.u32 %s121, 1
        %s277 = smul.addr %s276, 4
        %s278 = scalar_lea.vmem [#allocation10], %s277
        // Predicated region
        $region41: #{tpu_custom_call.1} parent=31 // pred_check
          %p279 = pneg %p134
        $region42: #{tpu_custom_call.1} parent=31 // pred_check_branch
          %281 = sbr.rel (%p279) target = $region44
        $region43: #{tpu_custom_call.1} parent=31 // pred_region
          %282 = dma.done %s275, 64
        $region44: #{tpu_custom_call.1} parent=31 // pred_fallthru
          _
        %s283 = sand.u32 %s61, 1
        %s284 = scalar_lea.sflag [#allocation6], %s283
        %s285 = sand.u32 %s61, 1
        %s286 = smul.addr %s285, 4
        %s287 = scalar_lea.vmem [#allocation5], %s286
        %p288 = pneg %p74
        %p289 = pneg %p71
        %s290 = sand.u32 %s23, 1
        %s291 = scalar_lea.sflag [#allocation9], %s290
        %s292 = sand.u32 %s91, 1
        %s293 = smul.addr %s292, 4
        %s294 = scalar_lea.vmem [#allocation8], %s293
        %p295 = pneg %p104
        %p296 = pneg %p101
        %s297 = sand.u32 %s23, 1
        %s298 = scalar_lea.sflag [#allocation9], %s297
        %s299 = sand.u32 %s121, 1
        %s300 = smul.addr %s299, 4
        %s301 = scalar_lea.vmem [#allocation10], %s300
        %p302 = pneg %p134
        %p303 = pneg %p131
        %p304 = pneg %p164
        %p305 = pneg %p161
        %s306 = sand.u32 %s151, 1
        %s307 = scalar_lea.sflag [#allocation7], %s306
        %s308 = sand.u32 %s151, 1
        %s309 = smul.addr %s308, 4
        %s310 = scalar_lea.vmem [#allocation11], %s309
        %p312 = scmp.eq.s32.totalorder %s32, 0
        // Predicated region
        $region45: #{tpu_custom_call.1} parent=31 // pred_check
          %p313 = pneg %p312
        $region46: #{tpu_custom_call.1} parent=31 // pred_check_branch
          %315 = sbr.rel (%p313) target = $region48
        $region47: #{tpu_custom_call.1} parent=31 // pred_region
          %vm316 = vcmask 7168
          %317 = vst.msk [vmem:[#allocation2] sm:$0xff] %vm316, -inf
          %318 = vst.msk [vmem:[#allocation3] sm:$0xff] %vm316, 0.0
          %vm319 = vcmask 261120
          %320 = vst.msk [vmem:[#allocation4] sm:$0xff] %vm319, 0.0
        $region48: #{tpu_custom_call.1} parent=31 // pred_fallthru
          _
        %s321 = smul.u32 %s31, 8
        %s322 = smul.u32 %s32, 8
        %p323 = scmp.lt.s32.totalorder %s321, 0
        %s324 = ssub.s32 0, %s321
        %s325 = scalar_select %p323, %s324, %s321
        %s326 = sand.u32 %s325, 15
        %s327 = ssub.s32 0, %s326
        %s328 = scalar_select %p323, %s327, %s326
        %p329 = scmp.ne.s32.totalorder %s328, 0
        %p330 = scmp.lt.s32.totalorder %s328, 0
        %p331 = pnand %p330, %p329
        %p332 = pneg %p331
        %s333 = sadd.s32 %s328, 16
        %s334 = scalar_select %p332, %s333, %s328
        %s335 = sadd.s32 %s334, 7
        %p336 = scmp.le.s32.totalorder %s322, %s335
        // Predicated region
        $region49: #{tpu_custom_call.1} parent=31 // pred_check
          %p337 = pneg %p336
        $region50: #{tpu_custom_call.1} parent=31 // pred_check_branch
          %339 = sbr.rel (%p337) target = $region52
        $region51: #{tpu_custom_call.1} parent=31 // pred_region
          %v340 = vld [vmem:[%s260] sm:$0xf]
          %v341 = vld [vmem:[%s269] sm:$0xf]
          %v342 = vld [vmem:[%s278] sm:$0xf]
          %vm343 = vcmask 261120
          %v345 = vsel %vm343, %v340, 0
          %v348 = vsel %vm343, %v341, 0
          %350 = vmatprep.subr.bf16.mxu0 0
          %351 = vmatpush1.bf16.xpose.msra.mxu0 %v348
          %352 = vmatprep.subr.bf16.mxu0 0
          %353 = vmatpush1.bf16.xpose.msra.mxu0 0
          %354 = vmatprep.subr.bf16.mxu0 0
          %355 = vmatpush1.bf16.xpose.msra.mxu0 0
          %356 = vmatprep.subr.bf16.mxu0 0
          %357 = vmatpush1.bf16.xpose.msra.mxu0 0
          %358 = vmatprep.subr.bf16.mxu0 0
          %359 = vmatpush1.bf16.xpose.msra.mxu0 0
          %360 = vmatprep.subr.bf16.mxu0 0
          %361 = vmatpush1.bf16.xpose.msra.mxu0 0
          %362 = vmatprep.subr.bf16.mxu0 0
          %363 = vmatpush1.bf16.xpose.msra.mxu0 0
          %364 = vmatprep.subr.bf16.mxu0 0
          %365 = vmatpush1.bf16.xpose.msra.mxu0 0
          %366 = vmatprep.subr.bf16.mxu0 0
          %367 = vmatpush1.bf16.xpose.msra.mxu0 0
          %368 = vmatprep.subr.bf16.mxu0 0
          %369 = vmatpush1.bf16.xpose.msra.mxu0 0
          %370 = vmatprep.subr.bf16.mxu0 0
          %371 = vmatpush1.bf16.xpose.msra.mxu0 0
          %372 = vmatprep.subr.bf16.mxu0 0
          %373 = vmatpush1.bf16.xpose.msra.mxu0 0
          %374 = vmatprep.subr.bf16.mxu0 0
          %375 = vmatpush1.bf16.xpose.msra.mxu0 0
          %376 = vmatprep.subr.bf16.mxu0 0
          %377 = vmatpush1.bf16.xpose.msra.mxu0 0
          %378 = vmatprep.subr.bf16.mxu0 0
          %379 = vmatpush1.bf16.xpose.msra.mxu0 0
          %380 = vmatprep.subr.bf16.mxu0 0
          %381 = vmatpush1.bf16.xpose.msra.mxu0 0
          %382 = vmatprep.mubr.bf16.mxu0 0
          %383 = vmatmul.mubr.bf16.gmra.mrb[0].mxu0 %v345
          %v384 = vpop.f32.mrb[0].mxu0
          %v385 = vadd.f32 0.0, %v384
          %v386 = vpop.f32.mrb[0].mxu0
          %v387 = vpop.f32.mrb[0].mxu0
          %v388 = vpop.f32.mrb[0].mxu0
          %389 = vdwg.mxu0
          %v390 = vmul.f32 %v385, 0.17677669
          %v391 = vlaneseq
          %v392 = vshrl.u32 %v391, 7
          %v393 = vstv %s321
          %v394 = vadd.s32 %v393, %v392
          %vm395 = vcmp.lt.s32.totalorder %v394, 0
          %v396 = vsub.s32 0, %v394
          %v397 = vsel %vm395, %v396, %v394
          %v398 = vshrl.u32 %v397, 4
          %v399 = vand.u32 %v397, 15
          %v400 = vsub.s32 0, %v399
          %v401 = vsel %vm395, %v400, %v399
          %vm402 = vcmp.ne.s32.totalorder %v401, 0
          %vm403 = vcmp.lt.s32.totalorder %v401, 0
          %vm404 = vmand %vm403, %vm402
          %v405 = vadd.s32 %v401, 16
          %v406 = vsel %vm404, %v405, %v401
          %v407 = vlaneseq
          %v408 = vand.u32 %v407, 127
          %v409 = vstv %s322
          %v410 = vadd.s32 %v409, %v408
          %vm411 = vcmp.gt.s32.totalorder %v410, %v406
          %v412 = vsel %vm411, -inf, %v390
          %v413 = vld [vmem:[#allocation2] sm:$0xff]
          %vm414 = vcmask 64512
          %v415 = vsel %vm414, %v412, -inf
          %416 = vmax.xlane.f32.xlu0 %v415
          %v417 = vpop.xlane.xlu0 %416
          %v418 = vmax.f32 %v413, %v417
          %v419 = vsub.f32 %v413, %v418
          %v420 = vmul.f32 %v419, 1.442695
          %v421 = vpow.pop %v420
          %423 = vset.pattern.permute.xlu0 0
          %424 = vperm.xlu0 %423, %v418
          %v425 = vpop.permute.xlu0 %424
          %v427 = vsub.f32 %v412, %v425
          %v428 = vmul.f32 %v427, 1.442695
          %v429 = vpow.pop %v428
          %v430 = vld [vmem:[#allocation3] sm:$0xff]
          %v431 = vmul.f32 %v421, %v430
          %v432 = vsel %vm414, %v429, 0.0
          %433 = vadd.xlane.f32.xlu0 %v432
          %v434 = vpop.xlane.xlu0 %433
          %v435 = vadd.f32 %v431, %v434
          %vm436 = vcmask 7168
          %437 = vst.msk [vmem:[#allocation3] sm:$0xff] %vm436, %v435
          %v438 = vld [vmem:[#allocation4] sm:$0xff]
          %440 = vset.pattern.permute.xlu0 0
          %441 = vperm.xlu0 %440, %v421
          %v442 = vpop.permute.xlu0 %441
          %v444 = vmul.f32 %v442, %v438
          %v445 = vpack.c.bf16 %v429, %v429
          %v447 = vsel %vm414, %v445, 0
          %vm449 = vcmask 1043456
          %v451 = vsel %vm449, %v342, 0
          %453 = vmatprep.subr.bf16.mxu0 0
          %454 = vmatpush1.bf16.msra.mxu0 %v451
          %455 = vmatprep.subr.bf16.mxu0 0
          %456 = vmatpush1.bf16.msra.mxu0 0
          %457 = vmatprep.subr.bf16.mxu0 0
          %458 = vmatpush1.bf16.msra.mxu0 0
          %459 = vmatprep.subr.bf16.mxu0 0
          %460 = vmatpush1.bf16.msra.mxu0 0
          %461 = vmatprep.subr.bf16.mxu0 0
          %462 = vmatpush1.bf16.msra.mxu0 0
          %463 = vmatprep.subr.bf16.mxu0 0
          %464 = vmatpush1.bf16.msra.mxu0 0
          %465 = vmatprep.subr.bf16.mxu0 0
          %466 = vmatpush1.bf16.msra.mxu0 0
          %467 = vmatprep.subr.bf16.mxu0 0
          %468 = vmatpush1.bf16.msra.mxu0 0
          %469 = vmatprep.subr.bf16.mxu0 0
          %470 = vmatpush1.bf16.msra.mxu0 0
          %471 = vmatprep.subr.bf16.mxu0 0
          %472 = vmatpush1.bf16.msra.mxu0 0
          %473 = vmatprep.subr.bf16.mxu0 0
          %474 = vmatpush1.bf16.msra.mxu0 0
          %475 = vmatprep.subr.bf16.mxu0 0
          %476 = vmatpush1.bf16.msra.mxu0 0
          %477 = vmatprep.subr.bf16.mxu0 0
          %478 = vmatpush1.bf16.msra.mxu0 0
          %479 = vmatprep.subr.bf16.mxu0 0
          %480 = vmatpush1.bf16.msra.mxu0 0
          %481 = vmatprep.subr.bf16.mxu0 0
          %482 = vmatpush1.bf16.msra.mxu0 0
          %483 = vmatprep.subr.bf16.mxu0 0
          %484 = vmatpush1.bf16.msra.mxu0 0
          %485 = vmatprep.mubr.bf16.mxu0 0
          %486 = vmatmul.mubr.bf16.gmra.mrb[0].mxu0 %v447
          %v487 = vpop.f32.mrb[0].mxu0
          %v488 = vadd.f32 0.0, %v487
          %v489 = vpop.f32.mrb[0].mxu0
          %v490 = vpop.f32.mrb[0].mxu0
          %v491 = vpop.f32.mrb[0].mxu0
          %492 = vdwg.mxu0
          %v493 = vadd.f32 %v444, %v488
          %494 = vst.msk [vmem:[#allocation4] sm:$0xff] %vm343, %v493
          %495 = vst.msk [vmem:[#allocation2] sm:$0xff] %vm436, %v418
        $region52: #{tpu_custom_call.1} parent=31 // pred_fallthru
          _
        %p496 = scmp.eq.s32.totalorder %s32, 1
        // Predicated region
        $region53: #{tpu_custom_call.1} parent=31 // pred_check
          %p497 = pneg %p496
        $region54: #{tpu_custom_call.1} parent=31 // pred_check_branch
          %499 = sbr.rel (%p497) target = $region56
        $region55: #{tpu_custom_call.1} parent=31 // pred_region
          %v500 = vld [vmem:[#allocation3] sm:$0xff]
          %v501 = vrcp.pop %v500
          %v502 = vld [vmem:[#allocation4] sm:$0xff]
          %504 = vset.pattern.permute.xlu0 0
          %505 = vperm.xlu0 %504, %v501
          %v506 = vpop.permute.xlu0 %505
          %v508 = vmul.f32 %v502, %v506
          %v509 = vpack.c.bf16 %v508, %v508
          %vm510 = vcmask 257024
          %511 = vst.msk [vmem:[%s310] sm:$0xf] %vm510, %v509
        $region56: #{tpu_custom_call.1} parent=31 // pred_fallthru
          _
        %s512 = sand.u32 %s151, 1
        %s513 = scalar_lea.sflag [#allocation7], %s512
        %s514 = sand.u32 %s151, 1
        %s515 = smul.addr %s514, 4
        %s516 = scalar_lea.vmem [#allocation11], %s515
        // Predicated region
        $region57: #{tpu_custom_call.1} parent=31 // pred_check
          %p517 = pneg %p161
        $region58: #{tpu_custom_call.1} parent=31 // pred_check_branch
          %519 = sbr.rel (%p517) target = $region60
        $region59: #{tpu_custom_call.1} parent=31 // pred_region
          %s521 = ssub.s32 64, 64
          %522 = vsyncadd %s513, %s521
          %s523 = smul.addr %s30, 4
          %s524 = sadd.s32 %s31, %s523
          %s525 = smul.addr %s29, 8
          %s526 = sadd.s32 %s524, %s525
          %s527 = smul.addr %s526, 64
          %s528 = scalar_lea.hbm %s3, %s527
          %s530 = sshll.u32 %s516, 4
          %s531 = int_to_ptr.vmem [resolvable:$true] %s530
          %533 = dma.vmem_to_hbm [thread:$0]  %s531, 64, %s528, %s513
        $region60: #{tpu_custom_call.1} parent=31 // pred_fallthru
          _
      $region32: #{tpu_custom_call.1} parent=5 // pred_fallthru
        _
      %p534 = scmp.le.s32.totalorder 2, %s18
      // Predicated region
      $region61: #{tpu_custom_call.1} parent=5 // pred_check
        %p535 = pneg %p534
      $region62: #{tpu_custom_call.1} parent=5 // pred_check_branch
        %537 = sbr.rel (%p535) target = $region64
      $region63: #{tpu_custom_call.1} parent=5 // pred_region
        %s538 = ssub.s32 %s18, 2
        // Predicated region
        $region65: #{tpu_custom_call.1} parent=63 // pred_check
          %p539 = pneg %p167
        $region66: #{tpu_custom_call.1} parent=63 // pred_check_branch
          %541 = sbr.rel (%p539) target = $region68
        $region67: #{tpu_custom_call.1} parent=63 // pred_region
          %s542 = sand.u32 %s152, 1
          %s543 = scalar_lea.sflag [#allocation7], %s542
          %s544 = sand.u32 %s152, 1
          %s545 = smul.addr %s544, 4
          %s546 = scalar_lea.vmem [#allocation11], %s545
          %547 = dma.done %s543, 64
        $region68: #{tpu_custom_call.1} parent=63 // pred_fallthru
          _
      $region64: #{tpu_custom_call.1} parent=5 // pred_fallthru
        _
    $region6: #{tpu_custom_call.1} parent=1 // loop_footer
      %s22 = sadd.s32 1, %s18
    $region7: #{tpu_custom_call.1} parent=1 // loop_footer_branch
      %17 = sbr.rel target = $region3
    $region8: #{tpu_custom_call.1} parent=1 // loop_exit
      _
    %548 = vsyncpa [#allocation6], 1
    %s549 = scalar_lea.sflag [#allocation6], 1
    %550 = vsyncpa %s549, 1
    %551 = vsyncpa [#allocation9], 1
    %s552 = scalar_lea.sflag [#allocation9], 1
    %553 = vsyncpa %s552, 1
    %554 = vsyncpa [#allocation7], 1
    %s555 = scalar_lea.sflag [#allocation7], 1
    %556 = vsyncpa %s555, 1

</llo_original>
